<compile_context>
chip_gen: v6e
topology: v6e:2x2x1
jax: 0.10.0
libtpu: 0.0.40
codegen_flags: <defaults>
</compile_context>

<pallas_src>
import functools

import jax
import jax.numpy as jnp
from jax import lax
from jax.experimental import pallas as pl
from jax.experimental.pallas import tpu as pltpu


# ----------------------------------------------------------------------------
# Fused Pallas kernel: input_map + cycle + output_map, one batch element / step
# ----------------------------------------------------------------------------
def _munet_fused_kernel(x_ref, w_in_ref, b_in_ref, w_cyc_ref, b_cyc_ref,
                        w_out_ref, b_out_ref, o_ref, *, H, W):
    """Shapes (all VMEM blocks, f32):
      x_ref     : (1, Cin, H*W)        flattened NCHW input slab
      w_in_ref  : (Cb, 9*Cin)          im2col-packed 3x3 weight
      b_in_ref  : (Cb, 1)
      w_cyc_ref : (levels, Cb, 9*Cb)   stacked cycle weights (VMEM resident)
      b_cyc_ref : (levels, Cb, 1)
      w_out_ref : (Cout, Cb)           1x1 conv weight
      b_out_ref : (Cout, 1)
      o_ref     : (1, Cout, H*W)       lane-dense output (reshaped to NCHW outside)
    """
    HW = H * W
    P = W + 1                      # flat zero-halo width on each side
    levels = w_cyc_ref.shape[0]

    # Lane masks that suppress row wrap-around for the dx=-1 / dx=+1 taps.
    # Hoisted: computed once per grid step, reused by every layer.
    col = lax.broadcasted_iota(jnp.int32, (1, HW), 1) % W
    not_left = (col != 0).astype(jnp.float32)        # kills x == 0     (dx = 0 taps)
    not_right = (col != W - 1).astype(jnp.float32)   # kills x == W - 1 (dx = 2 taps)

    def conv3x3_relu(a, w_mat, bias):
        """a: (C, H*W) flat activation; w_mat: (Cout, 9*C); bias: (Cout, 1)."""
        c = a.shape[0]
        zpad = jnp.zeros((c, P), jnp.float32)
        apad = jnp.concatenate([zpad, a, zpad], axis=1)      # (C, H*W + 2W + 2)
        taps = []
        for dy in range(3):
            for dx in range(3):
                start = dy * W + dx                          # static lane offset
                t = apad[:, start:start + HW]                # (C, H*W) shifted view
                if dx == 0:
                    t = t * not_left
                elif dx == 2:
                    t = t * not_right
                taps.append(t)
        patches = jnp.concatenate(taps, axis=0)              # (9C, H*W) im2col
        acc = jnp.dot(w_mat, patches,                        # single MXU push
                      preferred_element_type=jnp.float32)    # (Cout, H*W)
        return jnp.maximum(acc + bias, 0.0)                  # bias + ReLU, 2 vregs

    # input_map: Conv3x3(in -> base) + ReLU
    h = conv3x3_relu(x_ref[0].astype(jnp.float32), w_in_ref[...], b_in_ref[...])

    # cycle: levels x [Conv3x3(base -> base) + ReLU]; activation stays on-chip.
    def cycle_body(l, a):
        return conv3x3_relu(a, w_cyc_ref[l], b_cyc_ref[l])

    h = lax.fori_loop(0, levels, cycle_body, h, unroll=True)

    # output_map: Conv1x1(base -> out) == (Cout, Cb) @ (Cb, H*W); lane-dense store.
    y = jnp.dot(w_out_ref[...], h, preferred_element_type=jnp.float32)
    o_ref[0] = (y + b_out_ref[...]).astype(o_ref.dtype)


# ----------------------------------------------------------------------------
# Wrapper: packs weights, sets up BlockSpecs, grid over batch
# ----------------------------------------------------------------------------
def munet_base_forward(params, x_nchw):
    """Mirrors MuNetBase.forward: output_map(cycle(input_map(x))). NCHW in/out."""
    N, cin, H, W = x_nchw.shape
    levels = params["w_cyc"].shape[0]
    cb = params["w_in"].shape[-1]
    cout = params["w_out"].shape[-1]
    HW = H * W

    # One-time weight packing into im2col matrices (tiny XLA ops, no HBM churn
    # inside the kernel).  Row order of the packed K axis is (dy, dx, cin).
    w_in_mat = jnp.transpose(params["w_in"], (3, 0, 1, 2)).reshape(cb, 9 * cin)
    b_in = params["b_in"].reshape(cb, 1)
    w_cyc_mat = jnp.transpose(params["w_cyc"], (0, 4, 1, 2, 3)).reshape(levels, cb, 9 * cb)
    b_cyc = params["b_cyc"].reshape(levels, cb, 1)
    w_out_mat = params["w_out"].T                 # (Cout, Cb)
    b_out = params["b_out"].reshape(cout, 1)

    x_flat = x_nchw.reshape(N, cin, HW)           # free, contiguous reshape

    kernel = functools.partial(_munet_fused_kernel, H=H, W=W)
    y = pl.pallas_call(
        kernel,
        out_shape=jax.ShapeDtypeStruct((N, cout, HW), x_nchw.dtype),
        grid_spec=pltpu.PrefetchScalarGridSpec(
            num_scalar_prefetch=0,
            grid=(N,),
            in_specs=[
                pl.BlockSpec((1, cin, HW), lambda n: (n, 0, 0)),
                pl.BlockSpec((cb, 9 * cin), lambda n: (0, 0)),
                pl.BlockSpec((cb, 1), lambda n: (0, 0)),
                pl.BlockSpec((levels, cb, 9 * cb), lambda n: (0, 0, 0)),
                pl.BlockSpec((levels, cb, 1), lambda n: (0, 0, 0)),
                pl.BlockSpec((cout, cb), lambda n: (0, 0)),
                pl.BlockSpec((cout, 1), lambda n: (0, 0)),
            ],
            out_specs=pl.BlockSpec((1, cout, HW), lambda n: (n, 0, 0)),
        ),
        compiler_params=pltpu.CompilerParams(
            dimension_semantics=("parallel",)),
    )(x_flat, w_in_mat, b_in, w_cyc_mat, b_cyc, w_out_mat, b_out)

    return y.reshape(N, cout, H, W)               # NCHW, no transpose needed


# ----------------------------------------------------------------------------
# Parameters (deterministic, matching the module's conv shapes)
# ----------------------------------------------------------------------------
def munet_base_init_params(key, levels, in_channels, base_channels, out_channels):
    ks = jax.random.split(key, 6)
    p = {}
    # input_map: Conv2d(in_channels -> base_channels, 3x3), HWIO weight
    p["w_in"] = 0.1 * jax.random.normal(ks[0], (3, 3, in_channels, base_channels), jnp.float32)
    p["b_in"] = 0.1 * jax.random.normal(ks[1], (base_channels,), jnp.float32)
    # cycle: stacked (levels, 3, 3, base, base) / (levels, base)
    p["w_cyc"] = 0.1 * jax.random.normal(ks[2], (levels, 3, 3, base_channels, base_channels), jnp.float32)
    p["b_cyc"] = 0.1 * jax.random.normal(ks[3], (levels, base_channels), jnp.float32)
    # output_map: Conv2d(base -> out_channels, 1x1)
    p["w_out"] = 0.1 * jax.random.normal(ks[4], (base_channels, out_channels), jnp.float32)
    p["b_out"] = 0.1 * jax.random.normal(ks[5], (out_channels,), jnp.float32)
    return p


# ----------------------------------------------------------------------------
# Pure-JAX reference (correctness check)
# ----------------------------------------------------------------------------
def _ref_forward(params, x_nchw):
    dn = ("NHWC", "HWIO", "NHWC")
    x = jnp.transpose(x_nchw, (0, 2, 3, 1))
    h = lax.conv_general_dilated(x, params["w_in"], (1, 1), "SAME",
                                 dimension_numbers=dn) + params["b_in"]
    h = jnp.maximum(h, 0.0)
    for l in range(params["w_cyc"].shape[0]):
        h = lax.conv_general_dilated(h, params["w_cyc"][l], (1, 1), "SAME",
                                     dimension_numbers=dn) + params["b_cyc"][l]
        h = jnp.maximum(h, 0.0)
    y = lax.conv_general_dilated(h, params["w_out"][None, None], (1, 1), "SAME",
                                 dimension_numbers=dn) + params["b_out"]
    return jnp.transpose(y, (0, 3, 1, 2))


if __name__ == "__main__":
    levels = 2
    in_channels = 4
    base_channels = 8
    out_channels = 4
    N, H, W = 2, 16, 16

    key = jax.random.PRNGKey(0)
    k_x, k_p = jax.random.split(key)
    x = jax.random.normal(k_x, (N, in_channels, H, W), jnp.float32)   # NCHW, like torch
    params = munet_base_init_params(k_p, levels, in_channels, base_channels, out_channels)

    out = munet_base_forward(params, x)
    out = jax.block_until_ready(out)

    ref = _ref_forward(params, x)
    assert out.shape == (N, out_channels, H, W), out.shape
    assert jnp.allclose(out, ref, atol=1e-3, rtol=1e-3), \
        float(jnp.max(jnp.abs(out - ref)))

    print("KERNEL_OK")
</pallas_src>

<mosaic_0001>
module attributes {stable_mosaic.version = 11 : i64} {
  func.func @_munet_fused_kernel(%arg0: i32, %arg1: memref<1x4x256xf32, #tpu.memory_space<vmem>>, %arg2: memref<8x36xf32, #tpu.memory_space<vmem>>, %arg3: memref<8x1xf32, #tpu.memory_space<vmem>>, %arg4: memref<2x8x72xf32, #tpu.memory_space<vmem>>, %arg5: memref<2x8x1xf32, #tpu.memory_space<vmem>>, %arg6: memref<4x8xf32, #tpu.memory_space<vmem>>, %arg7: memref<4x1xf32, #tpu.memory_space<vmem>>, %arg8: memref<1x4x256xf32, #tpu.memory_space<vmem>>) attributes {dimension_semantics = [#tpu.dimension_semantics<parallel>], iteration_bounds = array<i64: 2>, scalar_prefetch = 0 : i64, scratch_operands = 0 : i64, tpu.core_type = #tpu.core_type<tc>, window_params = [{transform_indices = @transform_0, window_bounds = array<i64: 1, 4, 256>}, {pipeline_mode = #tpu.pipeline_mode<synchronous>, transform_indices = @transform_1, window_bounds = array<i64: 8, 36>}, {pipeline_mode = #tpu.pipeline_mode<synchronous>, transform_indices = @transform_2, window_bounds = array<i64: 8, 1>}, {pipeline_mode = #tpu.pipeline_mode<synchronous>, transform_indices = @transform_3, window_bounds = array<i64: 2, 8, 72>}, {pipeline_mode = #tpu.pipeline_mode<synchronous>, transform_indices = @transform_4, window_bounds = array<i64: 2, 8, 1>}, {pipeline_mode = #tpu.pipeline_mode<synchronous>, transform_indices = @transform_5, window_bounds = array<i64: 4, 8>}, {pipeline_mode = #tpu.pipeline_mode<synchronous>, transform_indices = @transform_6, window_bounds = array<i64: 4, 1>}, {transform_indices = @transform_7, window_bounds = array<i64: 1, 4, 256>}]} {
    %0 = tpu.iota {dimensions = array<i32: 1>} : vector<1x256xi32>
    %c16_i32 = arith.constant 16 : i32
    %c0_i32 = arith.constant 0 : i32
    %1 = arith.cmpi eq, %c16_i32, %c0_i32 : i32
    %c1_i32 = arith.constant 1 : i32
    %2 = arith.select %1, %c1_i32, %c16_i32 : i32
    %3 = vector.broadcast %2 : i32 to vector<1x256xi32>
    %4 = arith.remsi %0, %3 : vector<1x256xi32>
    %c0_i32_0 = arith.constant 0 : i32
    %5 = vector.broadcast %c0_i32_0 : i32 to vector<1x256xi32>
    %6 = arith.cmpi ne, %4, %5 : vector<1x256xi32>
    %c0_i32_1 = arith.constant 0 : i32
    %7 = vector.broadcast %c0_i32_1 : i32 to vector<1x256xi32>
    %8 = arith.cmpi slt, %4, %7 : vector<1x256xi32>
    %c0_i32_2 = arith.constant 0 : i32
    %9 = arith.cmpi slt, %2, %c0_i32_2 : i32
    %10 = vector.broadcast %9 : i1 to vector<1x256xi1>
    %11 = vector.broadcast %10 : vector<1x256xi1> to vector<1x256xi1>
    %12 = arith.xori %8, %11 : vector<1x256xi1>
    %13 = arith.andi %12, %6 : vector<1x256xi1>
    %14 = vector.broadcast %2 : i32 to vector<1x256xi32>
    %15 = arith.addi %4, %14 : vector<1x256xi32>
    %16 = arith.select %13, %15, %4 : vector<1x256xi1>, vector<1x256xi32>
    %c0_i32_3 = arith.constant 0 : i32
    %17 = vector.broadcast %c0_i32_3 : i32 to vector<1x256xi32>
    %18 = arith.cmpi ne, %16, %17 : vector<1x256xi32>
    %19 = arith.extui %18 : vector<1x256xi1> to vector<1x256xi32>
    %20 = arith.sitofp %19 : vector<1x256xi32> to vector<1x256xf32>
    %c15_i32 = arith.constant 15 : i32
    %21 = vector.broadcast %c15_i32 : i32 to vector<1x256xi32>
    %22 = arith.cmpi ne, %16, %21 : vector<1x256xi32>
    %23 = arith.extui %22 : vector<1x256xi1> to vector<1x256xi32>
    %24 = arith.sitofp %23 : vector<1x256xi32> to vector<1x256xf32>
    %c0 = arith.constant 0 : index
    %c0_4 = arith.constant 0 : index
    %c0_5 = arith.constant 0 : index
    %25 = vector.load %arg1[%c0, %c0_4, %c0_5] : memref<1x4x256xf32, #tpu.memory_space<vmem>>, vector<1x4x256xf32>
    %26 = vector.shape_cast %25 : vector<1x4x256xf32> to vector<4x256xf32>
    %c0_6 = arith.constant 0 : index
    %c0_7 = arith.constant 0 : index
    %27 = vector.load %arg2[%c0_6, %c0_7] : memref<8x36xf32, #tpu.memory_space<vmem>>, vector<8x36xf32>
    %c0_8 = arith.constant 0 : index
    %c0_9 = arith.constant 0 : index
    %28 = vector.load %arg3[%c0_8, %c0_9] : memref<8x1xf32, #tpu.memory_space<vmem>>, vector<8x1xf32>
    %cst = arith.constant 0.000000e+00 : f32
    %29 = vector.broadcast %cst : f32 to vector<4x17xf32>
    %30 = tpu.concatenate %29, %26, %29 in 1 : vector<4x17xf32>, vector<4x256xf32>, vector<4x17xf32> -> vector<4x290xf32>
    %31 = vector.extract_strided_slice %30 {offsets = [0, 0], sizes = [4, 256], strides = [1, 1]} : vector<4x290xf32> to vector<4x256xf32>
    %32 = vector.broadcast %20 : vector<1x256xf32> to vector<4x256xf32>
    %33 = arith.mulf %31, %32 : vector<4x256xf32>
    %34 = vector.extract_strided_slice %30 {offsets = [0, 1], sizes = [4, 256], strides = [1, 1]} : vector<4x290xf32> to vector<4x256xf32>
    %35 = vector.extract_strided_slice %30 {offsets = [0, 2], sizes = [4, 256], strides = [1, 1]} : vector<4x290xf32> to vector<4x256xf32>
    %36 = vector.broadcast %24 : vector<1x256xf32> to vector<4x256xf32>
    %37 = arith.mulf %35, %36 : vector<4x256xf32>
    %38 = vector.extract_strided_slice %30 {offsets = [0, 16], sizes = [4, 256], strides = [1, 1]} : vector<4x290xf32> to vector<4x256xf32>
    %39 = vector.broadcast %20 : vector<1x256xf32> to vector<4x256xf32>
    %40 = arith.mulf %38, %39 : vector<4x256xf32>
    %41 = vector.extract_strided_slice %30 {offsets = [0, 17], sizes = [4, 256], strides = [1, 1]} : vector<4x290xf32> to vector<4x256xf32>
    %42 = vector.extract_strided_slice %30 {offsets = [0, 18], sizes = [4, 256], strides = [1, 1]} : vector<4x290xf32> to vector<4x256xf32>
    %43 = vector.broadcast %24 : vector<1x256xf32> to vector<4x256xf32>
    %44 = arith.mulf %42, %43 : vector<4x256xf32>
    %45 = vector.extract_strided_slice %30 {offsets = [0, 32], sizes = [4, 256], strides = [1, 1]} : vector<4x290xf32> to vector<4x256xf32>
    %46 = vector.broadcast %20 : vector<1x256xf32> to vector<4x256xf32>
    %47 = arith.mulf %45, %46 : vector<4x256xf32>
    %48 = vector.extract_strided_slice %30 {offsets = [0, 33], sizes = [4, 256], strides = [1, 1]} : vector<4x290xf32> to vector<4x256xf32>
    %49 = vector.extract_strided_slice %30 {offsets = [0, 34], sizes = [4, 256], strides = [1, 1]} : vector<4x290xf32> to vector<4x256xf32>
    %50 = vector.broadcast %24 : vector<1x256xf32> to vector<4x256xf32>
    %51 = arith.mulf %49, %50 : vector<4x256xf32>
    %52 = tpu.concatenate %33, %34, %37, %40, %41, %44, %47, %48, %51 in 0 : vector<4x256xf32>, vector<4x256xf32>, vector<4x256xf32>, vector<4x256xf32>, vector<4x256xf32>, vector<4x256xf32>, vector<4x256xf32>, vector<4x256xf32>, vector<4x256xf32> -> vector<36x256xf32>
    %cst_10 = arith.constant dense<0.000000e+00> : vector<8x256xf32>
    %53 = tpu.matmul %27, %52, %cst_10 {dimension_numbers = #tpu.dot_dimension_numbers<[1], [0], [0], [1], [0, 0, 1, 1], [], []>} : vector<8x36xf32>, vector<36x256xf32>, vector<8x256xf32> -> vector<8x256xf32>
    %54 = vector.broadcast %28 : vector<8x1xf32> to vector<8x256xf32>
    %55 = arith.addf %53, %54 : vector<8x256xf32>
    %cst_11 = arith.constant 0.000000e+00 : f32
    %56 = vector.broadcast %cst_11 : f32 to vector<8x256xf32>
    %57 = arith.maximumf %55, %56 : vector<8x256xf32>
    %c0_i32_12 = arith.constant 0 : i32
    %58 = arith.index_cast %c0_i32_12 : i32 to index
    %c0_13 = arith.constant 0 : index
    %c0_14 = arith.constant 0 : index
    %59 = vector.load %arg4[%58, %c0_13, %c0_14] : memref<2x8x72xf32, #tpu.memory_space<vmem>>, vector<1x8x72xf32>
    %60 = vector.shape_cast %59 : vector<1x8x72xf32> to vector<8x72xf32>
    %61 = arith.index_cast %c0_i32_12 : i32 to index
    %c0_15 = arith.constant 0 : index
    %c0_16 = arith.constant 0 : index
    %62 = vector.load %arg5[%61, %c0_15, %c0_16] : memref<2x8x1xf32, #tpu.memory_space<vmem>>, vector<1x8x1xf32>
    %63 = vector.shape_cast %62 : vector<1x8x1xf32> to vector<8x1xf32>
    %cst_17 = arith.constant 0.000000e+00 : f32
    %64 = vector.broadcast %cst_17 : f32 to vector<8x17xf32>
    %65 = tpu.concatenate %64, %57, %64 in 1 : vector<8x17xf32>, vector<8x256xf32>, vector<8x17xf32> -> vector<8x290xf32>
    %66 = vector.extract_strided_slice %65 {offsets = [0, 0], sizes = [8, 256], strides = [1, 1]} : vector<8x290xf32> to vector<8x256xf32>
    %67 = vector.broadcast %20 : vector<1x256xf32> to vector<8x256xf32>
    %68 = arith.mulf %66, %67 : vector<8x256xf32>
    %69 = vector.extract_strided_slice %65 {offsets = [0, 1], sizes = [8, 256], strides = [1, 1]} : vector<8x290xf32> to vector<8x256xf32>
    %70 = vector.extract_strided_slice %65 {offsets = [0, 2], sizes = [8, 256], strides = [1, 1]} : vector<8x290xf32> to vector<8x256xf32>
    %71 = vector.broadcast %24 : vector<1x256xf32> to vector<8x256xf32>
    %72 = arith.mulf %70, %71 : vector<8x256xf32>
    %73 = vector.extract_strided_slice %65 {offsets = [0, 16], sizes = [8, 256], strides = [1, 1]} : vector<8x290xf32> to vector<8x256xf32>
    %74 = vector.broadcast %20 : vector<1x256xf32> to vector<8x256xf32>
    %75 = arith.mulf %73, %74 : vector<8x256xf32>
    %76 = vector.extract_strided_slice %65 {offsets = [0, 17], sizes = [8, 256], strides = [1, 1]} : vector<8x290xf32> to vector<8x256xf32>
    %77 = vector.extract_strided_slice %65 {offsets = [0, 18], sizes = [8, 256], strides = [1, 1]} : vector<8x290xf32> to vector<8x256xf32>
    %78 = vector.broadcast %24 : vector<1x256xf32> to vector<8x256xf32>
    %79 = arith.mulf %77, %78 : vector<8x256xf32>
    %80 = vector.extract_strided_slice %65 {offsets = [0, 32], sizes = [8, 256], strides = [1, 1]} : vector<8x290xf32> to vector<8x256xf32>
    %81 = vector.broadcast %20 : vector<1x256xf32> to vector<8x256xf32>
    %82 = arith.mulf %80, %81 : vector<8x256xf32>
    %83 = vector.extract_strided_slice %65 {offsets = [0, 33], sizes = [8, 256], strides = [1, 1]} : vector<8x290xf32> to vector<8x256xf32>
    %84 = vector.extract_strided_slice %65 {offsets = [0, 34], sizes = [8, 256], strides = [1, 1]} : vector<8x290xf32> to vector<8x256xf32>
    %85 = vector.broadcast %24 : vector<1x256xf32> to vector<8x256xf32>
    %86 = arith.mulf %84, %85 : vector<8x256xf32>
    %87 = tpu.concatenate %68, %69, %72, %75, %76, %79, %82, %83, %86 in 0 : vector<8x256xf32>, vector<8x256xf32>, vector<8x256xf32>, vector<8x256xf32>, vector<8x256xf32>, vector<8x256xf32>, vector<8x256xf32>, vector<8x256xf32>, vector<8x256xf32> -> vector<72x256xf32>
    %cst_18 = arith.constant dense<0.000000e+00> : vector<8x256xf32>
    %88 = tpu.matmul %60, %87, %cst_18 {dimension_numbers = #tpu.dot_dimension_numbers<[1], [0], [0], [1], [0, 0, 1, 1], [], []>} : vector<8x72xf32>, vector<72x256xf32>, vector<8x256xf32> -> vector<8x256xf32>
    %89 = vector.broadcast %63 : vector<8x1xf32> to vector<8x256xf32>
    %90 = arith.addf %88, %89 : vector<8x256xf32>
    %cst_19 = arith.constant 0.000000e+00 : f32
    %91 = vector.broadcast %cst_19 : f32 to vector<8x256xf32>
    %92 = arith.maximumf %90, %91 : vector<8x256xf32>
    %c1_i32_20 = arith.constant 1 : i32
    %93 = arith.index_cast %c1_i32_20 : i32 to index
    %c0_21 = arith.constant 0 : index
    %c0_22 = arith.constant 0 : index
    %94 = vector.load %arg4[%93, %c0_21, %c0_22] : memref<2x8x72xf32, #tpu.memory_space<vmem>>, vector<1x8x72xf32>
    %95 = vector.shape_cast %94 : vector<1x8x72xf32> to vector<8x72xf32>
    %96 = arith.index_cast %c1_i32_20 : i32 to index
    %c0_23 = arith.constant 0 : index
    %c0_24 = arith.constant 0 : index
    %97 = vector.load %arg5[%96, %c0_23, %c0_24] : memref<2x8x1xf32, #tpu.memory_space<vmem>>, vector<1x8x1xf32>
    %98 = vector.shape_cast %97 : vector<1x8x1xf32> to vector<8x1xf32>
    %cst_25 = arith.constant 0.000000e+00 : f32
    %99 = vector.broadcast %cst_25 : f32 to vector<8x17xf32>
    %100 = tpu.concatenate %99, %92, %99 in 1 : vector<8x17xf32>, vector<8x256xf32>, vector<8x17xf32> -> vector<8x290xf32>
    %101 = vector.extract_strided_slice %100 {offsets = [0, 0], sizes = [8, 256], strides = [1, 1]} : vector<8x290xf32> to vector<8x256xf32>
    %102 = vector.broadcast %20 : vector<1x256xf32> to vector<8x256xf32>
    %103 = arith.mulf %101, %102 : vector<8x256xf32>
    %104 = vector.extract_strided_slice %100 {offsets = [0, 1], sizes = [8, 256], strides = [1, 1]} : vector<8x290xf32> to vector<8x256xf32>
    %105 = vector.extract_strided_slice %100 {offsets = [0, 2], sizes = [8, 256], strides = [1, 1]} : vector<8x290xf32> to vector<8x256xf32>
    %106 = vector.broadcast %24 : vector<1x256xf32> to vector<8x256xf32>
    %107 = arith.mulf %105, %106 : vector<8x256xf32>
    %108 = vector.extract_strided_slice %100 {offsets = [0, 16], sizes = [8, 256], strides = [1, 1]} : vector<8x290xf32> to vector<8x256xf32>
    %109 = vector.broadcast %20 : vector<1x256xf32> to vector<8x256xf32>
    %110 = arith.mulf %108, %109 : vector<8x256xf32>
    %111 = vector.extract_strided_slice %100 {offsets = [0, 17], sizes = [8, 256], strides = [1, 1]} : vector<8x290xf32> to vector<8x256xf32>
    %112 = vector.extract_strided_slice %100 {offsets = [0, 18], sizes = [8, 256], strides = [1, 1]} : vector<8x290xf32> to vector<8x256xf32>
    %113 = vector.broadcast %24 : vector<1x256xf32> to vector<8x256xf32>
    %114 = arith.mulf %112, %113 : vector<8x256xf32>
    %115 = vector.extract_strided_slice %100 {offsets = [0, 32], sizes = [8, 256], strides = [1, 1]} : vector<8x290xf32> to vector<8x256xf32>
    %116 = vector.broadcast %20 : vector<1x256xf32> to vector<8x256xf32>
    %117 = arith.mulf %115, %116 : vector<8x256xf32>
    %118 = vector.extract_strided_slice %100 {offsets = [0, 33], sizes = [8, 256], strides = [1, 1]} : vector<8x290xf32> to vector<8x256xf32>
    %119 = vector.extract_strided_slice %100 {offsets = [0, 34], sizes = [8, 256], strides = [1, 1]} : vector<8x290xf32> to vector<8x256xf32>
    %120 = vector.broadcast %24 : vector<1x256xf32> to vector<8x256xf32>
    %121 = arith.mulf %119, %120 : vector<8x256xf32>
    %122 = tpu.concatenate %103, %104, %107, %110, %111, %114, %117, %118, %121 in 0 : vector<8x256xf32>, vector<8x256xf32>, vector<8x256xf32>, vector<8x256xf32>, vector<8x256xf32>, vector<8x256xf32>, vector<8x256xf32>, vector<8x256xf32>, vector<8x256xf32> -> vector<72x256xf32>
    %cst_26 = arith.constant dense<0.000000e+00> : vector<8x256xf32>
    %123 = tpu.matmul %95, %122, %cst_26 {dimension_numbers = #tpu.dot_dimension_numbers<[1], [0], [0], [1], [0, 0, 1, 1], [], []>} : vector<8x72xf32>, vector<72x256xf32>, vector<8x256xf32> -> vector<8x256xf32>
    %124 = vector.broadcast %98 : vector<8x1xf32> to vector<8x256xf32>
    %125 = arith.addf %123, %124 : vector<8x256xf32>
    %cst_27 = arith.constant 0.000000e+00 : f32
    %126 = vector.broadcast %cst_27 : f32 to vector<8x256xf32>
    %127 = arith.maximumf %125, %126 : vector<8x256xf32>
    %c2_i32 = arith.constant 2 : i32
    %c0_28 = arith.constant 0 : index
    %c0_29 = arith.constant 0 : index
    %128 = vector.load %arg6[%c0_28, %c0_29] : memref<4x8xf32, #tpu.memory_space<vmem>>, vector<4x8xf32>
    %cst_30 = arith.constant dense<0.000000e+00> : vector<4x256xf32>
    %129 = tpu.matmul %128, %127, %cst_30 {dimension_numbers = #tpu.dot_dimension_numbers<[1], [0], [0], [1], [0, 0, 1, 1], [], []>} : vector<4x8xf32>, vector<8x256xf32>, vector<4x256xf32> -> vector<4x256xf32>
    %c0_31 = arith.constant 0 : index
    %c0_32 = arith.constant 0 : index
    %130 = vector.load %arg7[%c0_31, %c0_32] : memref<4x1xf32, #tpu.memory_space<vmem>>, vector<4x1xf32>
    %131 = vector.broadcast %130 : vector<4x1xf32> to vector<4x256xf32>
    %132 = arith.addf %129, %131 : vector<4x256xf32>
    %c0_33 = arith.constant 0 : index
    %c0_34 = arith.constant 0 : index
    %c0_35 = arith.constant 0 : index
    %133 = vector.load %arg8[%c0_33, %c0_34, %c0_35] : memref<1x4x256xf32, #tpu.memory_space<vmem>>, vector<1x4x256xf32>
    %134 = vector.shape_cast %133 : vector<1x4x256xf32> to vector<4x256xf32>
    %135 = vector.shape_cast %132 : vector<4x256xf32> to vector<1x4x256xf32>
    tpu.vector_store %arg8[%c0_33, %c0_34, %c0_35], %135 {strides = array<i32>} : memref<1x4x256xf32, #tpu.memory_space<vmem>>, vector<1x4x256xf32>,
    return
  }
  func.func @transform_0(%arg0: i32) -> (i32, i32, i32) {
    %c0_i32 = arith.constant 0 : i32
    %c0_i32_0 = arith.constant 0 : i32
    %c0_i32_1 = arith.constant 0 : i32
    return %arg0, %c0_i32, %c0_i32_0 : i32, i32, i32
  }
  func.func @transform_1(%arg0: i32) -> (i32, i32) {
    %c0_i32 = arith.constant 0 : i32
    %c0_i32_0 = arith.constant 0 : i32
    %c0_i32_1 = arith.constant 0 : i32
    return %c0_i32, %c0_i32_0 : i32, i32
  }
  func.func @transform_2(%arg0: i32) -> (i32, i32) {
    %c0_i32 = arith.constant 0 : i32
    %c0_i32_0 = arith.constant 0 : i32
    %c0_i32_1 = arith.constant 0 : i32
    return %c0_i32, %c0_i32_0 : i32, i32
  }
  func.func @transform_3(%arg0: i32) -> (i32, i32, i32) {
    %c0_i32 = arith.constant 0 : i32
    %c0_i32_0 = arith.constant 0 : i32
    %c0_i32_1 = arith.constant 0 : i32
    %c0_i32_2 = arith.constant 0 : i32
    return %c0_i32, %c0_i32_0, %c0_i32_1 : i32, i32, i32
  }
  func.func @transform_4(%arg0: i32) -> (i32, i32, i32) {
    %c0_i32 = arith.constant 0 : i32
    %c0_i32_0 = arith.constant 0 : i32
    %c0_i32_1 = arith.constant 0 : i32
    %c0_i32_2 = arith.constant 0 : i32
    return %c0_i32, %c0_i32_0, %c0_i32_1 : i32, i32, i32
  }
  func.func @transform_5(%arg0: i32) -> (i32, i32) {
    %c0_i32 = arith.constant 0 : i32
    %c0_i32_0 = arith.constant 0 : i32
    %c0_i32_1 = arith.constant 0 : i32
    return %c0_i32, %c0_i32_0 : i32, i32
  }
  func.func @transform_6(%arg0: i32) -> (i32, i32) {
    %c0_i32 = arith.constant 0 : i32
    %c0_i32_0 = arith.constant 0 : i32
    %c0_i32_1 = arith.constant 0 : i32
    return %c0_i32, %c0_i32_0 : i32, i32
  }
  func.func @transform_7(%arg0: i32) -> (i32, i32, i32) {
    %c0_i32 = arith.constant 0 : i32
    %c0_i32_0 = arith.constant 0 : i32
    %c0_i32_1 = arith.constant 0 : i32
    return %arg0, %c0_i32, %c0_i32_0 : i32, i32, i32
  }
}

</mosaic_0001>

<llo_original>
// kernel: tpu_custom_call.1
$region0: #{tpu_custom_call.1}
  #allocation0 [shape = 'u32[]', space=smem, size = 0x4, offset = 0x4, fixed_abs, tag = 'smem constant byte address 0x4 - core index']
  #allocation1 [shape = 'u32[144,128]{1,0:T(1,128)}', space=vmem, size = 0x12000, scoped, tag = 'internal scratch']
  %s0 = inlined_call_operand.vmem [shape: f32[2,4,256], index: 0, kind: input, shape index: {}]
  %s1 = inlined_call_operand.hbm [shape: f32[8,36], index: 1, kind: input, shape index: {}]
  %s2 = inlined_call_operand.vmem [shape: f32[8,1], index: 2, kind: input, shape index: {}]
  %s3 = inlined_call_operand.vmem [shape: f32[2,8,72], index: 3, kind: input, shape index: {}]
  %s4 = inlined_call_operand.vmem [shape: f32[2,8,1], index: 4, kind: input, shape index: {}]
  %s5 = inlined_call_operand.vmem [shape: f32[4,8], index: 5, kind: input, shape index: {}]
  %s6 = inlined_call_operand.vmem [shape: f32[4,1], index: 6, kind: input, shape index: {}]
  %s7 = inlined_call_operand.hbm [shape: f32[2,4,256], index: 7, kind: output, shape index: {}]
  %s8 = sld [smem:[#allocation0]]
  $region65: #{tpu_custom_call.1} parent=0
    _
  %s10 = ssub.s32 1, %s8
  %s11 = scalar_select 0, %s10, %s8
  $region1: #{tpu_custom_call.1} parent=0
    #allocation2 [shape = 'u8[4096]{0}', space=vmem, size = 0x1000, scoped, tag = 'input window, operand 1, single buffered']
    #allocation3 [shape = 's32[2]{0}', space=sflag, size = 0x8, scoped, tag = 'scoped memory for tpu_custom_call.1']
    #allocation4 [shape = 's32[2]{0}', space=sflag, size = 0x8, scoped, tag = 'scoped memory for tpu_custom_call.1']
    #allocation5 [shape = 'u8[8192]{0}', space=vmem, size = 0x2000, scoped, tag = 'output window, operand 0']
    %12 = vsyncpa [#allocation3], 0
    %13 = vsyncpa [#allocation4], 0
    %s14 = scalar_lea.sflag [#allocation4], 1
    %15 = vsyncpa %s14, 0
    loop: start=0, step=1, limit=4
    $region2: #{tpu_custom_call.1} parent=1 // loop_pre_header
      _
    $region3: #{tpu_custom_call.1} parent=1 // loop_header
      %s17 = sphi 0, %s21
      %p18 = scmp.ge.s32.totalorder %s17, 4
      %s27 = sphi 0, %s29
      %s30 = sphi 0, %s27
      %s31 = sphi 0, %s30
      %s47 = sphi 0, %s31
      %s51 = sphi 0, %s51
      %s53 = sphi 0, %s51
      %s54 = sphi 0, %s53
      %s68 = sphi 0, %s54
      %s72 = sphi 0, %s72
      %s74 = sphi 0, %s72
      %s75 = sphi 0, %s74
      %s89 = sphi 0, %s75
      %s93 = sphi 0, %s93
      %s95 = sphi 0, %s93
      %s96 = sphi 0, %s95
      %s110 = sphi 0, %s96
      %s114 = sphi 0, %s114
      %s116 = sphi 0, %s114
      %s117 = sphi 0, %s116
      %s131 = sphi 0, %s117
      %s135 = sphi 0, %s135
      %s137 = sphi 0, %s135
      %s138 = sphi 0, %s137
      %s152 = sphi 0, %s138
      %s156 = sphi 0, %s156
      %s158 = sphi 0, %s156
      %s159 = sphi 0, %s158
      %s173 = sphi 0, %s159
      %s179 = sphi 0, %s181
      %s182 = sphi 0, %s179
      %s183 = sphi 0, %s182
      %s199 = sphi 0, %s183
    $region4: #{tpu_custom_call.1} parent=1 // loop_header_branch
      %20 = sbr.rel (%p18) target = $region8
    $region5: #{tpu_custom_call.1} parent=1 // loop_body
      %s22 = ssub.s32 %s17, 1
      %s23 = ssub.s32 %s17, 2
      %s24 = sadd.s32 %s17, 1
      %s25 = ssub.s32 %s17, %s24
      %p26 = scmp.eq.s32.totalorder %s25, 0
      %s28 = sadd.s32 %s27, 1
      %s29 = scalar_select %p26, %s27, %s28
      %p32 = pneg %p26
      %p33 = scmp.eq.s32.totalorder %s17, 1
      %p34 = por %p32, %p33
      %p35 = scmp.ne.s32.totalorder %s27, %s30
      %p36 = scmp.eq.s32.totalorder %s17, 0
      %p37 = por %p35, %p36
      %p38 = scmp.ne.s32.totalorder %s27, %s30
      %p39 = scmp.eq.s32.totalorder %s22, 1
      %p40 = por %p38, %p39
      %p41 = scmp.ne.s32.totalorder %s30, %s31
      %p42 = scmp.eq.s32.totalorder %s22, 0
      %p43 = por %p41, %p42
      %p44 = scmp.ne.s32.totalorder %s30, %s31
      %p45 = scmp.eq.s32.totalorder %s23, 1
      %p46 = por %p44, %p45
      %p48 = scmp.ne.s32.totalorder %s31, %s47
      %p49 = scmp.eq.s32.totalorder %s23, 0
      %p50 = por %p48, %p49
      %s52 = sadd.s32 %s51, 1
      %p55 = scmp.eq.s32.totalorder %s17, 1
      %p56 = scmp.ne.s32.totalorder %s51, %s53
      %p57 = scmp.eq.s32.totalorder %s17, 0
      %p58 = por %p56, %p57
      %p59 = scmp.ne.s32.totalorder %s51, %s53
      %p60 = scmp.eq.s32.totalorder %s22, 1
      %p61 = por %p59, %p60
      %p62 = scmp.ne.s32.totalorder %s53, %s54
      %p63 = scmp.eq.s32.totalorder %s22, 0
      %p64 = por %p62, %p63
      %p65 = scmp.ne.s32.totalorder %s53, %s54
      %p66 = scmp.eq.s32.totalorder %s23, 1
      %p67 = por %p65, %p66
      %p69 = scmp.ne.s32.totalorder %s54, %s68
      %p70 = scmp.eq.s32.totalorder %s23, 0
      %p71 = por %p69, %p70
      %s73 = sadd.s32 %s72, 1
      %p76 = scmp.eq.s32.totalorder %s17, 1
      %p77 = scmp.ne.s32.totalorder %s72, %s74
      %p78 = scmp.eq.s32.totalorder %s17, 0
      %p79 = por %p77, %p78
      %p80 = scmp.ne.s32.totalorder %s72, %s74
      %p81 = scmp.eq.s32.totalorder %s22, 1
      %p82 = por %p80, %p81
      %p83 = scmp.ne.s32.totalorder %s74, %s75
      %p84 = scmp.eq.s32.totalorder %s22, 0
      %p85 = por %p83, %p84
      %p86 = scmp.ne.s32.totalorder %s74, %s75
      %p87 = scmp.eq.s32.totalorder %s23, 1
      %p88 = por %p86, %p87
      %p90 = scmp.ne.s32.totalorder %s75, %s89
      %p91 = scmp.eq.s32.totalorder %s23, 0
      %p92 = por %p90, %p91
      %s94 = sadd.s32 %s93, 1
      %p97 = scmp.eq.s32.totalorder %s17, 1
      %p98 = scmp.ne.s32.totalorder %s93, %s95
      %p99 = scmp.eq.s32.totalorder %s17, 0
      %p100 = por %p98, %p99
      %p101 = scmp.ne.s32.totalorder %s93, %s95
      %p102 = scmp.eq.s32.totalorder %s22, 1
      %p103 = por %p101, %p102
      %p104 = scmp.ne.s32.totalorder %s95, %s96
      %p105 = scmp.eq.s32.totalorder %s22, 0
      %p106 = por %p104, %p105
      %p107 = scmp.ne.s32.totalorder %s95, %s96
      %p108 = scmp.eq.s32.totalorder %s23, 1
      %p109 = por %p107, %p108
      %p111 = scmp.ne.s32.totalorder %s96, %s110
      %p112 = scmp.eq.s32.totalorder %s23, 0
      %p113 = por %p111, %p112
      %s115 = sadd.s32 %s114, 1
      %p118 = scmp.eq.s32.totalorder %s17, 1
      %p119 = scmp.ne.s32.totalorder %s114, %s116
      %p120 = scmp.eq.s32.totalorder %s17, 0
      %p121 = por %p119, %p120
      %p122 = scmp.ne.s32.totalorder %s114, %s116
      %p123 = scmp.eq.s32.totalorder %s22, 1
      %p124 = por %p122, %p123
      %p125 = scmp.ne.s32.totalorder %s116, %s117
      %p126 = scmp.eq.s32.totalorder %s22, 0
      %p127 = por %p125, %p126
      %p128 = scmp.ne.s32.totalorder %s116, %s117
      %p129 = scmp.eq.s32.totalorder %s23, 1
      %p130 = por %p128, %p129
      %p132 = scmp.ne.s32.totalorder %s117, %s131
      %p133 = scmp.eq.s32.totalorder %s23, 0
      %p134 = por %p132, %p133
      %s136 = sadd.s32 %s135, 1
      %p139 = scmp.eq.s32.totalorder %s17, 1
      %p140 = scmp.ne.s32.totalorder %s135, %s137
      %p141 = scmp.eq.s32.totalorder %s17, 0
      %p142 = por %p140, %p141
      %p143 = scmp.ne.s32.totalorder %s135, %s137
      %p144 = scmp.eq.s32.totalorder %s22, 1
      %p145 = por %p143, %p144
      %p146 = scmp.ne.s32.totalorder %s137, %s138
      %p147 = scmp.eq.s32.totalorder %s22, 0
      %p148 = por %p146, %p147
      %p149 = scmp.ne.s32.totalorder %s137, %s138
      %p150 = scmp.eq.s32.totalorder %s23, 1
      %p151 = por %p149, %p150
      %p153 = scmp.ne.s32.totalorder %s138, %s152
      %p154 = scmp.eq.s32.totalorder %s23, 0
      %p155 = por %p153, %p154
      %s157 = sadd.s32 %s156, 1
      %p160 = scmp.eq.s32.totalorder %s17, 1
      %p161 = scmp.ne.s32.totalorder %s156, %s158
      %p162 = scmp.eq.s32.totalorder %s17, 0
      %p163 = por %p161, %p162
      %p164 = scmp.ne.s32.totalorder %s156, %s158
      %p165 = scmp.eq.s32.totalorder %s22, 1
      %p166 = por %p164, %p165
      %p167 = scmp.ne.s32.totalorder %s158, %s159
      %p168 = scmp.eq.s32.totalorder %s22, 0
      %p169 = por %p167, %p168
      %p170 = scmp.ne.s32.totalorder %s158, %s159
      %p171 = scmp.eq.s32.totalorder %s23, 1
      %p172 = por %p170, %p171
      %p174 = scmp.ne.s32.totalorder %s159, %s173
      %p175 = scmp.eq.s32.totalorder %s23, 0
      %p176 = por %p174, %p175
      %s177 = ssub.s32 %s17, %s24
      %p178 = scmp.eq.s32.totalorder %s177, 0
      %s180 = sadd.s32 %s179, 1
      %s181 = scalar_select %p178, %s179, %s180
      %p184 = pneg %p178
      %p185 = scmp.eq.s32.totalorder %s17, 1
      %p186 = por %p184, %p185
      %p187 = scmp.ne.s32.totalorder %s179, %s182
      %p188 = scmp.eq.s32.totalorder %s17, 0
      %p189 = por %p187, %p188
      %p190 = scmp.ne.s32.totalorder %s179, %s182
      %p191 = scmp.eq.s32.totalorder %s22, 1
      %p192 = por %p190, %p191
      %p193 = scmp.ne.s32.totalorder %s182, %s183
      %p194 = scmp.eq.s32.totalorder %s22, 0
      %p195 = por %p193, %p194
      %p196 = scmp.ne.s32.totalorder %s182, %s183
      %p197 = scmp.eq.s32.totalorder %s23, 1
      %p198 = por %p196, %p197
      %p200 = scmp.ne.s32.totalorder %s183, %s199
      %p201 = scmp.eq.s32.totalorder %s23, 0
      %p202 = por %p200, %p201
      %p203 = scmp.le.s32.totalorder 1, %s17
      %p204 = scmp.lt.s32.totalorder %s17, 3
      %p205 = pnand %p203, %p204
      %p206 = pneg %p205
      // Predicated region
      $region9: #{tpu_custom_call.1} parent=5 // pred_check
        _
      $region10: #{tpu_custom_call.1} parent=5 // pred_check_branch
        %208 = sbr.rel (%p205) target = $region12
      $region11: #{tpu_custom_call.1} parent=5 // pred_region
        %s209 = ssub.s32 %s17, 1
        // Predicated region
        $region13: #{tpu_custom_call.1} parent=11 // pred_check
          %p210 = pneg %p64
        $region14: #{tpu_custom_call.1} parent=11 // pred_check_branch
          %212 = sbr.rel (%p210) target = $region16
        $region15: #{tpu_custom_call.1} parent=11 // pred_region
          %s214 = ssub.s32 128, 128
          %215 = vsyncadd [#allocation3], %s214
          %s217 = sshll.u32 [#allocation2], 4
          %s218 = int_to_ptr.vmem [resolvable:$true] %s217
          %220 = dma.hbm_to_vmem [thread:$0]  %s1, 128, %s218, [#allocation3]
        $region16: #{tpu_custom_call.1} parent=11 // pred_fallthru
          _
        // Predicated region
        $region17: #{tpu_custom_call.1} parent=11 // pred_check
          %p221 = pneg %p85
        $region18: #{tpu_custom_call.1} parent=11 // pred_check_branch
          %223 = sbr.rel (%p221) target = $region20
        $region19: #{tpu_custom_call.1} parent=11 // pred_region
          _
        $region20: #{tpu_custom_call.1} parent=11 // pred_fallthru
          _
        // Predicated region
        $region21: #{tpu_custom_call.1} parent=11 // pred_check
          %p224 = pneg %p106
        $region22: #{tpu_custom_call.1} parent=11 // pred_check_branch
          %226 = sbr.rel (%p224) target = $region24
        $region23: #{tpu_custom_call.1} parent=11 // pred_region
          _
        $region24: #{tpu_custom_call.1} parent=11 // pred_fallthru
          _
        // Predicated region
        $region25: #{tpu_custom_call.1} parent=11 // pred_check
          %p227 = pneg %p127
        $region26: #{tpu_custom_call.1} parent=11 // pred_check_branch
          %229 = sbr.rel (%p227) target = $region28
        $region27: #{tpu_custom_call.1} parent=11 // pred_region
          _
        $region28: #{tpu_custom_call.1} parent=11 // pred_fallthru
          _
        // Predicated region
        $region29: #{tpu_custom_call.1} parent=11 // pred_check
          %p230 = pneg %p148
        $region30: #{tpu_custom_call.1} parent=11 // pred_check_branch
          %232 = sbr.rel (%p230) target = $region32
        $region31: #{tpu_custom_call.1} parent=11 // pred_region
          _
        $region32: #{tpu_custom_call.1} parent=11 // pred_fallthru
          _
        // Predicated region
        $region33: #{tpu_custom_call.1} parent=11 // pred_check
          %p233 = pneg %p169
        $region34: #{tpu_custom_call.1} parent=11 // pred_check_branch
          %235 = sbr.rel (%p233) target = $region36
        $region35: #{tpu_custom_call.1} parent=11 // pred_region
          _
        $region36: #{tpu_custom_call.1} parent=11 // pred_fallthru
          _
      $region12: #{tpu_custom_call.1} parent=5 // pred_fallthru
        _
      %p236 = scmp.lt.s32.totalorder %s17, 2
      // Predicated region
      $region37: #{tpu_custom_call.1} parent=5 // pred_check
        %p237 = pneg %p236
      $region38: #{tpu_custom_call.1} parent=5 // pred_check_branch
        %239 = sbr.rel (%p237) target = $region40
      $region39: #{tpu_custom_call.1} parent=5 // pred_region
        // Predicated region
        $region41: #{tpu_custom_call.1} parent=39 // pred_check
          %p240 = pneg %p37
        $region42: #{tpu_custom_call.1} parent=39 // pred_check_branch
          %242 = sbr.rel (%p240) target = $region44
        $region43: #{tpu_custom_call.1} parent=39 // pred_region
          %p243 = scmp.lt.s32.totalorder %s17, 1
          %s244 = scalar_select %p243, %s17, 1
          %s245 = smul.addr %s244, 2
          %s246 = smul.addr %s245, 4
          %s247 = scalar_lea.vmem %s0, %s246
        $region44: #{tpu_custom_call.1} parent=39 // pred_fallthru
          _
      $region40: #{tpu_custom_call.1} parent=5 // pred_fallthru
        _
      %p248 = scmp.le.s32.totalorder 1, %s17
      %p249 = scmp.lt.s32.totalorder %s17, 3
      %p250 = pnand %p248, %p249
      %p251 = pneg %p250
      // Predicated region
      $region45: #{tpu_custom_call.1} parent=5 // pred_check
        _
      $region46: #{tpu_custom_call.1} parent=5 // pred_check_branch
        %253 = sbr.rel (%p250) target = $region48
      $region47: #{tpu_custom_call.1} parent=5 // pred_region
        %s254 = ssub.s32 %s17, 1
        // Predicated region
        $region49: #{tpu_custom_call.1} parent=47 // pred_check
          %p255 = pneg %p64
        $region50: #{tpu_custom_call.1} parent=47 // pred_check_branch
          %257 = sbr.rel (%p255) target = $region52
        $region51: #{tpu_custom_call.1} parent=47 // pred_region
          %258 = dma.done [#allocation3], 128
        $region52: #{tpu_custom_call.1} parent=47 // pred_fallthru
          _
        %p259 = scmp.lt.s32.totalorder %s22, 1
        %s260 = scalar_select %p259, %s22, 1
        %s261 = smul.addr %s260, 2
        %s262 = smul.addr %s261, 4
        %s263 = scalar_lea.vmem %s0, %s262
        %p264 = pneg %p43
        %p265 = pneg %p40
        %p266 = pneg %p64
        %p267 = pneg %p61
        %p268 = pneg %p85
        %p269 = pneg %p82
        %p270 = pneg %p106
        %p271 = pneg %p103
        %p272 = pneg %p127
        %p273 = pneg %p124
        %p274 = pneg %p148
        %p275 = pneg %p145
        %p276 = pneg %p169
        %p277 = pneg %p166
        %p278 = pneg %p195
        %p279 = pneg %p192
        %s280 = sand.u32 %s182, 1
        %s281 = scalar_lea.sflag [#allocation4], %s280
        %s282 = sand.u32 %s182, 1
        %s283 = smul.addr %s282, 8
        %s284 = scalar_lea.vmem [#allocation5], %s283
        %p285 = scmp.lt.s32.totalorder %s22, 1
        %s286 = scalar_select %p285, %s22, 1
        %s287 = smul.addr %s286, 2
        %s288 = smul.addr %s287, 4
        %s289 = scalar_lea.vmem %s0, %s288
        %v290 = vlaneseq
        %v291 = vand.u32 %v290, 127
        %v292 = vadd.s32 %v291, 128
        %vm293 = vcmp.lt.s32.totalorder %v291, 0
        %v294 = vsub.s32 0, %v291
        %v295 = vsel %vm293, %v294, %v291
        %v296 = vshrl.u32 %v295, 4
        %v297 = vand.u32 %v295, 15
        %v298 = vsub.s32 0, %v297
        %v299 = vsel %vm293, %v298, %v297
        %vm300 = vcmp.lt.s32.totalorder %v292, 0
        %v301 = vsub.s32 0, %v292
        %v302 = vsel %vm300, %v301, %v292
        %v303 = vshrl.u32 %v302, 4
        %v304 = vand.u32 %v302, 15
        %v305 = vsub.s32 0, %v304
        %v306 = vsel %vm300, %v305, %v304
        %vm307 = vcmp.ne.s32.totalorder %v299, 0
        %vm308 = vcmp.ne.s32.totalorder %v306, 0
        %vm309 = vcmp.lt.s32.totalorder %v299, 0
        %vm310 = vcmp.lt.s32.totalorder %v306, 0
        %vm311 = vmand %vm309, %vm307
        %vm312 = vmand %vm310, %vm308
        %v313 = vadd.s32 %v299, 16
        %v314 = vadd.s32 %v306, 16
        %v315 = vsel %vm311, %v313, %v299
        %v316 = vsel %vm312, %v314, %v306
        %vm317 = vcmp.ne.s32.totalorder %v315, 0
        %vm318 = vcmp.ne.s32.totalorder %v316, 0
        %v319 = vsel %vm317, 1, 0
        %v320 = vsel %vm318, 1, 0
        %v321 = vcvt.s32.f32 %v319
        %v322 = vcvt.s32.f32 %v320
        %vm323 = vcmp.ne.s32.totalorder %v315, 15
        %vm324 = vcmp.ne.s32.totalorder %v316, 15
        %v325 = vsel %vm323, 1, 0
        %v326 = vsel %vm324, 1, 0
        %v327 = vcvt.s32.f32 %v325
        %v328 = vcvt.s32.f32 %v326
        %v329 = vld [vmem:[%s289] sm:$0xff]
        %v330 = vld [vmem:[#allocation2] sm:$0xff]
        %v331 = vld [vmem:[%s2] sm:$0xff]
        %v333 = vcombine.high %v329, %v329
        %334 = vrot.lane.b32.xlu0 %v329, 17
        %v335 = vpop.permute.xlu0 %334
        %336 = vrot.lane.b32.xlu0 %v333, 17
        %v337 = vpop.permute.xlu0 %336
        %vm338 = vcmask 138240
        %v339 = vsel %vm338, %v335, %v337
        %v343 = vsel %vm338, 0.0, %v335
        %v344 = vsel %vm338, %v337, 0.0
        %v345 = vmul.f32 %v343, %v321
        %v346 = vmul.f32 %v339, %v322
        %349 = vrot.lane.b32.xlu0 %v327, 2
        %v350 = vpop.permute.xlu0 %349
        %351 = vrot.lane.b32.xlu0 %v328, 2
        %v352 = vpop.permute.xlu0 %351
        %vm353 = vcmask 15360
        %v354 = vsel %vm353, %v350, %v352
        %v358 = vmul.f32 %v343, %v350
        %v359 = vmul.f32 %v339, %v354
        %v360 = vmul.f32 %v344, %v352
        %363 = vrot.lane.b32.xlu0 %v321, 16
        %v364 = vpop.permute.xlu0 %363
        %365 = vrot.lane.b32.xlu0 %v322, 16
        %v366 = vpop.permute.xlu0 %365
        %vm367 = vcmask 130048
        %v368 = vsel %vm367, %v364, %v366
        %v372 = vmul.f32 %v343, %v364
        %v373 = vmul.f32 %v339, %v368
        %v374 = vmul.f32 %v344, %v366
        %375 = vrot.lane.b32.xlu0 %v327, 18
        %v376 = vpop.permute.xlu0 %375
        %377 = vrot.lane.b32.xlu0 %v328, 18
        %v378 = vpop.permute.xlu0 %377
        %vm379 = vcmask 146432
        %v380 = vsel %vm379, %v376, %v378
        %v384 = vmul.f32 %v343, %v376
        %v385 = vmul.f32 %v339, %v380
        %v386 = vmul.f32 %v344, %v378
        %387 = vrot.lane.b32.xlu0 %v321, 32
        %v388 = vpop.permute.xlu0 %387
        %389 = vrot.lane.b32.xlu0 %v322, 32
        %v390 = vpop.permute.xlu0 %389
        %vm391 = vcmask 261120
        %v392 = vsel %vm391, %v388, %v390
        %v396 = vmul.f32 %v343, %v388
        %v397 = vmul.f32 %v339, %v392
        %v398 = vmul.f32 %v344, %v390
        %399 = vrot.lane.b32.xlu0 %v327, 34
        %v400 = vpop.permute.xlu0 %399
        %401 = vrot.lane.b32.xlu0 %v328, 34
        %v402 = vpop.permute.xlu0 %401
        %vm403 = vcmask 277504
        %v404 = vsel %vm403, %v400, %v402
        %v408 = vmul.f32 %v343, %v400
        %v409 = vmul.f32 %v339, %v404
        %v410 = vmul.f32 %v344, %v402
        %v413 = vrot.slane %v343, 4
        %v414 = vrot.slane %v339, 4
        %v415 = vrot.slane %v344, 4
        %416 = vrot.lane.b32.xlu0 %v413, 127
        %v417 = vpop.permute.xlu0 %416
        %418 = vrot.lane.b32.xlu0 %v414, 127
        %v419 = vpop.permute.xlu0 %418
        %420 = vrot.lane.b32.xlu0 %v415, 127
        %v421 = vpop.permute.xlu0 %420
        %vm422 = vcmask 1039360
        %v423 = vsel %vm422, %v417, %v419
        %v424 = vsel %vm422, %v419, %v421
        %430 = vrot.lane.b32.xlu0 %v358, 126
        %v431 = vpop.permute.xlu0 %430
        %432 = vrot.lane.b32.xlu0 %v359, 126
        %v433 = vpop.permute.xlu0 %432
        %434 = vrot.lane.b32.xlu0 %v360, 126
        %v435 = vpop.permute.xlu0 %434
        %vm436 = vcmask 1031168
        %v437 = vsel %vm436, %v431, %v433
        %v438 = vsel %vm436, %v433, %v435
        %v444 = vrot.slane %v372, 4
        %v445 = vrot.slane %v373, 4
        %v446 = vrot.slane %v374, 4
        %447 = vrot.lane.b32.xlu0 %v444, 112
        %v448 = vpop.permute.xlu0 %447
        %449 = vrot.lane.b32.xlu0 %v445, 112
        %v450 = vpop.permute.xlu0 %449
        %451 = vrot.lane.b32.xlu0 %v446, 112
        %v452 = vpop.permute.xlu0 %451
        %vm453 = vcmask 916480
        %v454 = vsel %vm453, %v448, %v450
        %v455 = vsel %vm453, %v450, %v452
        %458 = vrot.lane.b32.xlu0 %v343, 111
        %v459 = vpop.permute.xlu0 %458
        %460 = vrot.lane.b32.xlu0 %v339, 111
        %v461 = vpop.permute.xlu0 %460
        %462 = vrot.lane.b32.xlu0 %v344, 111
        %v463 = vpop.permute.xlu0 %462
        %vm464 = vcmask 908288
        %v465 = vsel %vm464, %v459, %v461
        %v466 = vsel %vm464, %v461, %v463
        %v472 = vrot.slane %v384, 4
        %v473 = vrot.slane %v385, 4
        %v474 = vrot.slane %v386, 4
        %475 = vrot.lane.b32.xlu0 %v472, 110
        %v476 = vpop.permute.xlu0 %475
        %477 = vrot.lane.b32.xlu0 %v473, 110
        %v478 = vpop.permute.xlu0 %477
        %479 = vrot.lane.b32.xlu0 %v474, 110
        %v480 = vpop.permute.xlu0 %479
        %vm481 = vcmask 900096
        %v482 = vsel %vm481, %v476, %v478
        %v483 = vsel %vm481, %v478, %v480
        %489 = vrot.lane.b32.xlu0 %v396, 96
        %v490 = vpop.permute.xlu0 %489
        %491 = vrot.lane.b32.xlu0 %v397, 96
        %v492 = vpop.permute.xlu0 %491
        %493 = vrot.lane.b32.xlu0 %v398, 96
        %v494 = vpop.permute.xlu0 %493
        %vm495 = vcmask 785408
        %v496 = vsel %vm495, %v490, %v492
        %v497 = vsel %vm495, %v492, %v494
        %500 = vrot.lane.b32.xlu0 %v413, 95
        %v501 = vpop.permute.xlu0 %500
        %502 = vrot.lane.b32.xlu0 %v414, 95
        %v503 = vpop.permute.xlu0 %502
        %504 = vrot.lane.b32.xlu0 %v415, 95
        %v505 = vpop.permute.xlu0 %504
        %vm506 = vcmask 777216
        %v507 = vsel %vm506, %v501, %v503
        %v508 = vsel %vm506, %v503, %v505
        %514 = vrot.lane.b32.xlu0 %v408, 94
        %v515 = vpop.permute.xlu0 %514
        %516 = vrot.lane.b32.xlu0 %v409, 94
        %v517 = vpop.permute.xlu0 %516
        %518 = vrot.lane.b32.xlu0 %v410, 94
        %v519 = vpop.permute.xlu0 %518
        %vm520 = vcmask 769024
        %v521 = vsel %vm520, %v515, %v517
        %v522 = vsel %vm520, %v517, %v519
        %vm523 = vcmask 1043456
        %v524 = vsel %vm523, %v345, %v423
        %v525 = vsel %vm523, %v346, %v424
        %v526 = vsel %vm523, %v437, %v454
        %v527 = vsel %vm523, %v438, %v455
        %v528 = vsel %vm523, %v465, %v482
        %v529 = vsel %vm523, %v466, %v483
        %v530 = vsel %vm523, %v496, %v507
        %v531 = vsel %vm523, %v497, %v508
        %533 = vset.pattern.permute.xlu0 0
        %534 = vperm.xlu0 %533, %v331
        %v535 = vpop.permute.xlu0 %534
        %vm537 = vcmask 293888
        %v539 = vsel %vm537, %v330, 0
        %v541 = vsel %vm523, %v521, 0
        %v543 = vsel %vm523, %v522, 0
        %545 = vmatprep.subr.mxu0 0.0
        %546 = vmatpush1.msra.mxu0 0.0
        %547 = vmatprep.subr.mxu0 0.0
        %548 = vmatpush1.msra.mxu0 0.0
        %549 = vmatprep.subr.mxu0 0.0
        %550 = vmatpush1.msra.mxu0 0.0
        %551 = vmatprep.subr.mxu0 0.0
        %552 = vmatpush1.msra.mxu0 0.0
        %553 = vmatprep.subr.mxu0 0.0
        %554 = vmatpush1.msra.mxu0 0.0
        %555 = vmatprep.subr.mxu0 0.0
        %556 = vmatpush1.msra.mxu0 0.0
        %557 = vmatprep.subr.mxu0 0.0
        %558 = vmatpush1.msra.mxu0 0.0
        %559 = vmatprep.subr.mxu0 0.0
        %560 = vmatpush1.msra.mxu0 0.0
        %561 = vmatprep.subr.mxu0 0.0
        %562 = vmatpush1.msra.mxu0 0.0
        %563 = vmatprep.subr.mxu0 0.0
        %564 = vmatpush1.msra.mxu0 0.0
        %565 = vmatprep.subr.mxu0 0.0
        %566 = vmatpush1.msra.mxu0 0.0
        %567 = vmatprep.subr.mxu0 %v543
        %568 = vmatpush1.msra.mxu0 %v541
        %569 = vmatprep.subr.mxu0 %v531
        %570 = vmatpush1.msra.mxu0 %v530
        %571 = vmatprep.subr.mxu0 %v529
        %572 = vmatpush1.msra.mxu0 %v528
        %573 = vmatprep.subr.mxu0 %v527
        %574 = vmatpush1.msra.mxu0 %v526
        %575 = vmatprep.subr.mxu0 %v525
        %576 = vmatpush1.msra.mxu0 %v524
        %577 = vmatprep.subr.mxu0 0.0
        %578 = vmatpush2.msra.mxu0 0.0
        %579 = vmatprep.subr.mxu0 0.0
        %580 = vmatpush2.msra.mxu0 0.0
        %581 = vmatprep.subr.mxu0 0.0
        %582 = vmatpush2.msra.mxu0 0.0
        %583 = vmatprep.subr.mxu0 0.0
        %584 = vmatpush2.msra.mxu0 0.0
        %585 = vmatprep.subr.mxu0 0.0
        %586 = vmatpush2.msra.mxu0 0.0
        %587 = vmatprep.subr.mxu0 0.0
        %588 = vmatpush2.msra.mxu0 0.0
        %589 = vmatprep.subr.mxu0 0.0
        %590 = vmatpush2.msra.mxu0 0.0
        %591 = vmatprep.subr.mxu0 0.0
        %592 = vmatpush2.msra.mxu0 0.0
        %593 = vmatprep.subr.mxu0 0.0
        %594 = vmatpush2.msra.mxu0 0.0
        %595 = vmatprep.subr.mxu0 0.0
        %596 = vmatpush2.msra.mxu0 0.0
        %597 = vmatprep.subr.mxu0 0.0
        %598 = vmatpush2.msra.mxu0 0.0
        %599 = vmatprep.subr.mxu0 0.0
        %600 = vmatpush2.msra.mxu0 0.0
        %601 = vmatprep.subr.mxu0 0.0
        %602 = vmatpush2.msra.mxu0 0.0
        %603 = vmatprep.subr.mxu0 0.0
        %604 = vmatpush2.msra.mxu0 0.0
        %605 = vmatprep.subr.mxu0 0.0
        %606 = vmatpush2.msra.mxu0 0.0
        %607 = vmatprep.subr.mxu0 0.0
        %608 = vmatpush2.msra.mxu0 0.0
        %609 = vmatprep.mubr.f32.mxu0 0.0
        %610 = vmatmul.mubr.f32.gmra.mxu0 %v539
        %v611 = vpop.f32.mrf.mxu0
        %v612 = vadd.f32 %v535, %v611
        %v613 = vpop.f32.mrf.mxu0
        %v614 = vadd.f32 %v535, %v613
        %615 = vdwg.mxu0
        %v616 = vmax.f32 %v612, 0.0
        %v617 = vmax.f32 %v614, 0.0
        %v618 = vld [vmem:[%s3] sm:$0xff]
        %v619 = vld [vmem:[%s4] sm:$0xff]
        %622 = vrot.lane.b32.xlu0 %v616, 17
        %v623 = vpop.permute.xlu0 %622
        %624 = vrot.lane.b32.xlu0 %v617, 17
        %v625 = vpop.permute.xlu0 %624
        %v626 = vsel %vm338, %v623, %v625
        %v630 = vsel %vm338, 0.0, %v623
        %v631 = vsel %vm338, %v625, 0.0
        %v632 = vmul.f32 %v630, %v321
        %v633 = vmul.f32 %v626, %v322
        %v634 = vmul.f32 %v630, %v350
        %v635 = vmul.f32 %v626, %v354
        %v636 = vmul.f32 %v631, %v352
        %v637 = vmul.f32 %v630, %v364
        %v638 = vmul.f32 %v626, %v368
        %v639 = vmul.f32 %v631, %v366
        %v640 = vmul.f32 %v630, %v376
        %v641 = vmul.f32 %v626, %v380
        %v642 = vmul.f32 %v631, %v378
        %v643 = vmul.f32 %v630, %v388
        %v644 = vmul.f32 %v626, %v392
        %v645 = vmul.f32 %v631, %v390
        %v646 = vmul.f32 %v630, %v400
        %v647 = vmul.f32 %v626, %v404
        %v648 = vmul.f32 %v631, %v402
        %651 = vrot.lane.b32.xlu0 %v630, 127
        %v652 = vpop.permute.xlu0 %651
        %653 = vrot.lane.b32.xlu0 %v626, 127
        %v654 = vpop.permute.xlu0 %653
        %655 = vrot.lane.b32.xlu0 %v631, 127
        %v656 = vpop.permute.xlu0 %655
        %v657 = vsel %vm422, %v652, %v654
        %v658 = vsel %vm422, %v654, %v656
        %664 = vrot.lane.b32.xlu0 %v634, 126
        %v665 = vpop.permute.xlu0 %664
        %666 = vrot.lane.b32.xlu0 %v635, 126
        %v667 = vpop.permute.xlu0 %666
        %668 = vrot.lane.b32.xlu0 %v636, 126
        %v669 = vpop.permute.xlu0 %668
        %v670 = vsel %vm436, %v665, %v667
        %v671 = vsel %vm436, %v667, %v669
        %677 = vrot.lane.b32.xlu0 %v637, 112
        %v678 = vpop.permute.xlu0 %677
        %679 = vrot.lane.b32.xlu0 %v638, 112
        %v680 = vpop.permute.xlu0 %679
        %681 = vrot.lane.b32.xlu0 %v639, 112
        %v682 = vpop.permute.xlu0 %681
        %v683 = vsel %vm453, %v678, %v680
        %v684 = vsel %vm453, %v680, %v682
        %687 = vrot.lane.b32.xlu0 %v630, 111
        %v688 = vpop.permute.xlu0 %687
        %689 = vrot.lane.b32.xlu0 %v626, 111
        %v690 = vpop.permute.xlu0 %689
        %691 = vrot.lane.b32.xlu0 %v631, 111
        %v692 = vpop.permute.xlu0 %691
        %v693 = vsel %vm464, %v688, %v690
        %v694 = vsel %vm464, %v690, %v692
        %700 = vrot.lane.b32.xlu0 %v640, 110
        %v701 = vpop.permute.xlu0 %700
        %702 = vrot.lane.b32.xlu0 %v641, 110
        %v703 = vpop.permute.xlu0 %702
        %704 = vrot.lane.b32.xlu0 %v642, 110
        %v705 = vpop.permute.xlu0 %704
        %v706 = vsel %vm481, %v701, %v703
        %v707 = vsel %vm481, %v703, %v705
        %713 = vrot.lane.b32.xlu0 %v643, 96
        %v714 = vpop.permute.xlu0 %713
        %715 = vrot.lane.b32.xlu0 %v644, 96
        %v716 = vpop.permute.xlu0 %715
        %717 = vrot.lane.b32.xlu0 %v645, 96
        %v718 = vpop.permute.xlu0 %717
        %v719 = vsel %vm495, %v714, %v716
        %v720 = vsel %vm495, %v716, %v718
        %723 = vrot.lane.b32.xlu0 %v630, 95
        %v724 = vpop.permute.xlu0 %723
        %725 = vrot.lane.b32.xlu0 %v626, 95
        %v726 = vpop.permute.xlu0 %725
        %727 = vrot.lane.b32.xlu0 %v631, 95
        %v728 = vpop.permute.xlu0 %727
        %v729 = vsel %vm506, %v724, %v726
        %v730 = vsel %vm506, %v726, %v728
        %736 = vrot.lane.b32.xlu0 %v646, 94
        %v737 = vpop.permute.xlu0 %736
        %738 = vrot.lane.b32.xlu0 %v647, 94
        %v739 = vpop.permute.xlu0 %738
        %740 = vrot.lane.b32.xlu0 %v648, 94
        %v741 = vpop.permute.xlu0 %740
        %v742 = vsel %vm520, %v737, %v739
        %v743 = vsel %vm520, %v739, %v741
        %747 = vset.pattern.permute.xlu0 0
        %748 = vperm.xlu0 %747, %v619
        %v749 = vpop.permute.xlu0 %748
        %vm751 = vcmask 588800
        %v753 = vsel %vm751, %v618, 0
        %755 = vmatprep.subr.mxu0 0.0
        %756 = vmatpush1.msra.mxu0 0.0
        %757 = vmatprep.subr.mxu0 0.0
        %758 = vmatpush1.msra.mxu0 0.0
        %759 = vmatprep.subr.mxu0 0.0
        %760 = vmatpush1.msra.mxu0 0.0
        %761 = vmatprep.subr.mxu0 0.0
        %762 = vmatpush1.msra.mxu0 0.0
        %763 = vmatprep.subr.mxu0 0.0
        %764 = vmatpush1.msra.mxu0 0.0
        %765 = vmatprep.subr.mxu0 0.0
        %766 = vmatpush1.msra.mxu0 0.0
        %767 = vmatprep.subr.mxu0 0.0
        %768 = vmatpush1.msra.mxu0 0.0
        %769 = vmatprep.subr.mxu0 %v743
        %770 = vmatpush1.msra.mxu0 %v742
        %771 = vmatprep.subr.mxu0 %v730
        %772 = vmatpush1.msra.mxu0 %v729
        %773 = vmatprep.subr.mxu0 %v720
        %774 = vmatpush1.msra.mxu0 %v719
        %775 = vmatprep.subr.mxu0 %v707
        %776 = vmatpush1.msra.mxu0 %v706
        %777 = vmatprep.subr.mxu0 %v694
        %778 = vmatpush1.msra.mxu0 %v693
        %779 = vmatprep.subr.mxu0 %v684
        %780 = vmatpush1.msra.mxu0 %v683
        %781 = vmatprep.subr.mxu0 %v671
        %782 = vmatpush1.msra.mxu0 %v670
        %783 = vmatprep.subr.mxu0 %v658
        %784 = vmatpush1.msra.mxu0 %v657
        %785 = vmatprep.subr.mxu0 %v633
        %786 = vmatpush1.msra.mxu0 %v632
        %787 = vmatprep.subr.mxu0 0.0
        %788 = vmatpush2.msra.mxu0 0.0
        %789 = vmatprep.subr.mxu0 0.0
        %790 = vmatpush2.msra.mxu0 0.0
        %791 = vmatprep.subr.mxu0 0.0
        %792 = vmatpush2.msra.mxu0 0.0
        %793 = vmatprep.subr.mxu0 0.0
        %794 = vmatpush2.msra.mxu0 0.0
        %795 = vmatprep.subr.mxu0 0.0
        %796 = vmatpush2.msra.mxu0 0.0
        %797 = vmatprep.subr.mxu0 0.0
        %798 = vmatpush2.msra.mxu0 0.0
        %799 = vmatprep.subr.mxu0 0.0
        %800 = vmatpush2.msra.mxu0 0.0
        %801 = vmatprep.subr.mxu0 0.0
        %802 = vmatpush2.msra.mxu0 0.0
        %803 = vmatprep.subr.mxu0 0.0
        %804 = vmatpush2.msra.mxu0 0.0
        %805 = vmatprep.subr.mxu0 0.0
        %806 = vmatpush2.msra.mxu0 0.0
        %807 = vmatprep.subr.mxu0 0.0
        %808 = vmatpush2.msra.mxu0 0.0
        %809 = vmatprep.subr.mxu0 0.0
        %810 = vmatpush2.msra.mxu0 0.0
        %811 = vmatprep.subr.mxu0 0.0
        %812 = vmatpush2.msra.mxu0 0.0
        %813 = vmatprep.subr.mxu0 0.0
        %814 = vmatpush2.msra.mxu0 0.0
        %815 = vmatprep.subr.mxu0 0.0
        %816 = vmatpush2.msra.mxu0 0.0
        %817 = vmatprep.subr.mxu0 0.0
        %818 = vmatpush2.msra.mxu0 0.0
        %819 = vmatprep.mubr.f32.mxu0 0.0
        %820 = vmatmul.mubr.f32.gmra.mxu0 %v753
        %v821 = vpop.f32.mrf.mxu0
        %v822 = vadd.f32 %v749, %v821
        %v823 = vpop.f32.mrf.mxu0
        %v824 = vadd.f32 %v749, %v823
        %825 = vdwg.mxu0
        %v826 = vmax.f32 %v822, 0.0
        %v827 = vmax.f32 %v824, 0.0
        %s828 = scalar_lea.vmem %s3, 8
        %v829 = vld [vmem:[%s828] sm:$0xff]
        %s830 = scalar_lea.vmem %s4, 8
        %v831 = vld [vmem:[%s830] sm:$0xff]
        %834 = vrot.lane.b32.xlu0 %v826, 17
        %v835 = vpop.permute.xlu0 %834
        %836 = vrot.lane.b32.xlu0 %v827, 17
        %v837 = vpop.permute.xlu0 %836
        %v838 = vsel %vm338, %v835, %v837
        %v842 = vsel %vm338, 0.0, %v835
        %v843 = vsel %vm338, %v837, 0.0
        %v844 = vmul.f32 %v842, %v321
        %v845 = vmul.f32 %v838, %v322
        %v846 = vmul.f32 %v842, %v350
        %v847 = vmul.f32 %v838, %v354
        %v848 = vmul.f32 %v843, %v352
        %v849 = vmul.f32 %v842, %v364
        %v850 = vmul.f32 %v838, %v368
        %v851 = vmul.f32 %v843, %v366
        %v852 = vmul.f32 %v842, %v376
        %v853 = vmul.f32 %v838, %v380
        %v854 = vmul.f32 %v843, %v378
        %v855 = vmul.f32 %v842, %v388
        %v856 = vmul.f32 %v838, %v392
        %v857 = vmul.f32 %v843, %v390
        %v858 = vmul.f32 %v842, %v400
        %v859 = vmul.f32 %v838, %v404
        %v860 = vmul.f32 %v843, %v402
        %863 = vrot.lane.b32.xlu0 %v842, 127
        %v864 = vpop.permute.xlu0 %863
        %865 = vrot.lane.b32.xlu0 %v838, 127
        %v866 = vpop.permute.xlu0 %865
        %867 = vrot.lane.b32.xlu0 %v843, 127
        %v868 = vpop.permute.xlu0 %867
        %v869 = vsel %vm422, %v864, %v866
        %v870 = vsel %vm422, %v866, %v868
        %876 = vrot.lane.b32.xlu0 %v846, 126
        %v877 = vpop.permute.xlu0 %876
        %878 = vrot.lane.b32.xlu0 %v847, 126
        %v879 = vpop.permute.xlu0 %878
        %880 = vrot.lane.b32.xlu0 %v848, 126
        %v881 = vpop.permute.xlu0 %880
        %v882 = vsel %vm436, %v877, %v879
        %v883 = vsel %vm436, %v879, %v881
        %889 = vrot.lane.b32.xlu0 %v849, 112
        %v890 = vpop.permute.xlu0 %889
        %891 = vrot.lane.b32.xlu0 %v850, 112
        %v892 = vpop.permute.xlu0 %891
        %893 = vrot.lane.b32.xlu0 %v851, 112
        %v894 = vpop.permute.xlu0 %893
        %v895 = vsel %vm453, %v890, %v892
        %v896 = vsel %vm453, %v892, %v894
        %899 = vrot.lane.b32.xlu0 %v842, 111
        %v900 = vpop.permute.xlu0 %899
        %901 = vrot.lane.b32.xlu0 %v838, 111
        %v902 = vpop.permute.xlu0 %901
        %903 = vrot.lane.b32.xlu0 %v843, 111
        %v904 = vpop.permute.xlu0 %903
        %v905 = vsel %vm464, %v900, %v902
        %v906 = vsel %vm464, %v902, %v904
        %912 = vrot.lane.b32.xlu0 %v852, 110
        %v913 = vpop.permute.xlu0 %912
        %914 = vrot.lane.b32.xlu0 %v853, 110
        %v915 = vpop.permute.xlu0 %914
        %916 = vrot.lane.b32.xlu0 %v854, 110
        %v917 = vpop.permute.xlu0 %916
        %v918 = vsel %vm481, %v913, %v915
        %v919 = vsel %vm481, %v915, %v917
        %925 = vrot.lane.b32.xlu0 %v855, 96
        %v926 = vpop.permute.xlu0 %925
        %927 = vrot.lane.b32.xlu0 %v856, 96
        %v928 = vpop.permute.xlu0 %927
        %929 = vrot.lane.b32.xlu0 %v857, 96
        %v930 = vpop.permute.xlu0 %929
        %v931 = vsel %vm495, %v926, %v928
        %v932 = vsel %vm495, %v928, %v930
        %935 = vrot.lane.b32.xlu0 %v842, 95
        %v936 = vpop.permute.xlu0 %935
        %937 = vrot.lane.b32.xlu0 %v838, 95
        %v938 = vpop.permute.xlu0 %937
        %939 = vrot.lane.b32.xlu0 %v843, 95
        %v940 = vpop.permute.xlu0 %939
        %v941 = vsel %vm506, %v936, %v938
        %v942 = vsel %vm506, %v938, %v940
        %948 = vrot.lane.b32.xlu0 %v858, 94
        %v949 = vpop.permute.xlu0 %948
        %950 = vrot.lane.b32.xlu0 %v859, 94
        %v951 = vpop.permute.xlu0 %950
        %952 = vrot.lane.b32.xlu0 %v860, 94
        %v953 = vpop.permute.xlu0 %952
        %v954 = vsel %vm520, %v949, %v951
        %v955 = vsel %vm520, %v951, %v953
        %959 = vset.pattern.permute.xlu0 0
        %960 = vperm.xlu0 %959, %v831
        %v961 = vpop.permute.xlu0 %960
        %v964 = vsel %vm751, %v829, 0
        %966 = vmatprep.subr.mxu0 0.0
        %967 = vmatpush1.msra.mxu0 0.0
        %968 = vmatprep.subr.mxu0 0.0
        %969 = vmatpush1.msra.mxu0 0.0
        %970 = vmatprep.subr.mxu0 0.0
        %971 = vmatpush1.msra.mxu0 0.0
        %972 = vmatprep.subr.mxu0 0.0
        %973 = vmatpush1.msra.mxu0 0.0
        %974 = vmatprep.subr.mxu0 0.0
        %975 = vmatpush1.msra.mxu0 0.0
        %976 = vmatprep.subr.mxu0 0.0
        %977 = vmatpush1.msra.mxu0 0.0
        %978 = vmatprep.subr.mxu0 0.0
        %979 = vmatpush1.msra.mxu0 0.0
        %980 = vmatprep.subr.mxu0 %v955
        %981 = vmatpush1.msra.mxu0 %v954
        %982 = vmatprep.subr.mxu0 %v942
        %983 = vmatpush1.msra.mxu0 %v941
        %984 = vmatprep.subr.mxu0 %v932
        %985 = vmatpush1.msra.mxu0 %v931
        %986 = vmatprep.subr.mxu0 %v919
        %987 = vmatpush1.msra.mxu0 %v918
        %988 = vmatprep.subr.mxu0 %v906
        %989 = vmatpush1.msra.mxu0 %v905
        %990 = vmatprep.subr.mxu0 %v896
        %991 = vmatpush1.msra.mxu0 %v895
        %992 = vmatprep.subr.mxu0 %v883
        %993 = vmatpush1.msra.mxu0 %v882
        %994 = vmatprep.subr.mxu0 %v870
        %995 = vmatpush1.msra.mxu0 %v869
        %996 = vmatprep.subr.mxu0 %v845
        %997 = vmatpush1.msra.mxu0 %v844
        %998 = vmatprep.subr.mxu0 0.0
        %999 = vmatpush2.msra.mxu0 0.0
        %1000 = vmatprep.subr.mxu0 0.0
        %1001 = vmatpush2.msra.mxu0 0.0
        %1002 = vmatprep.subr.mxu0 0.0
        %1003 = vmatpush2.msra.mxu0 0.0
        %1004 = vmatprep.subr.mxu0 0.0
        %1005 = vmatpush2.msra.mxu0 0.0
        %1006 = vmatprep.subr.mxu0 0.0
        %1007 = vmatpush2.msra.mxu0 0.0
        %1008 = vmatprep.subr.mxu0 0.0
        %1009 = vmatpush2.msra.mxu0 0.0
        %1010 = vmatprep.subr.mxu0 0.0
        %1011 = vmatpush2.msra.mxu0 0.0
        %1012 = vmatprep.subr.mxu0 0.0
        %1013 = vmatpush2.msra.mxu0 0.0
        %1014 = vmatprep.subr.mxu0 0.0
        %1015 = vmatpush2.msra.mxu0 0.0
        %1016 = vmatprep.subr.mxu0 0.0
        %1017 = vmatpush2.msra.mxu0 0.0
        %1018 = vmatprep.subr.mxu0 0.0
        %1019 = vmatpush2.msra.mxu0 0.0
        %1020 = vmatprep.subr.mxu0 0.0
        %1021 = vmatpush2.msra.mxu0 0.0
        %1022 = vmatprep.subr.mxu0 0.0
        %1023 = vmatpush2.msra.mxu0 0.0
        %1024 = vmatprep.subr.mxu0 0.0
        %1025 = vmatpush2.msra.mxu0 0.0
        %1026 = vmatprep.subr.mxu0 0.0
        %1027 = vmatpush2.msra.mxu0 0.0
        %1028 = vmatprep.subr.mxu0 0.0
        %1029 = vmatpush2.msra.mxu0 0.0
        %1030 = vmatprep.mubr.f32.mxu0 0.0
        %1031 = vmatmul.mubr.f32.gmra.mxu0 %v964
        %v1032 = vpop.f32.mrf.mxu0
        %v1033 = vadd.f32 %v961, %v1032
        %v1034 = vpop.f32.mrf.mxu0
        %v1035 = vadd.f32 %v961, %v1034
        %1036 = vdwg.mxu0
        %v1037 = vmax.f32 %v1033, 0.0
        %v1038 = vmax.f32 %v1035, 0.0
        %v1039 = vld [vmem:[%s5] sm:$0xf]
        %v1040 = vld [vmem:[%s6] sm:$0xf]
        %1042 = vset.pattern.permute.xlu0 0
        %1043 = vperm.xlu0 %1042, %v1040
        %v1044 = vpop.permute.xlu0 %1043
        %vm1046 = vcmask 64512
        %v1048 = vsel %vm1046, %v1039, 0
        %1050 = vmatprep.subr.mxu0 0.0
        %1051 = vmatpush1.msra.mxu0 0.0
        %1052 = vmatprep.subr.mxu0 0.0
        %1053 = vmatpush1.msra.mxu0 0.0
        %1054 = vmatprep.subr.mxu0 0.0
        %1055 = vmatpush1.msra.mxu0 0.0
        %1056 = vmatprep.subr.mxu0 0.0
        %1057 = vmatpush1.msra.mxu0 0.0
        %1058 = vmatprep.subr.mxu0 0.0
        %1059 = vmatpush1.msra.mxu0 0.0
        %1060 = vmatprep.subr.mxu0 0.0
        %1061 = vmatpush1.msra.mxu0 0.0
        %1062 = vmatprep.subr.mxu0 0.0
        %1063 = vmatpush1.msra.mxu0 0.0
        %1064 = vmatprep.subr.mxu0 0.0
        %1065 = vmatpush1.msra.mxu0 0.0
        %1066 = vmatprep.subr.mxu0 0.0
        %1067 = vmatpush1.msra.mxu0 0.0
        %1068 = vmatprep.subr.mxu0 0.0
        %1069 = vmatpush1.msra.mxu0 0.0
        %1070 = vmatprep.subr.mxu0 0.0
        %1071 = vmatpush1.msra.mxu0 0.0
        %1072 = vmatprep.subr.mxu0 0.0
        %1073 = vmatpush1.msra.mxu0 0.0
        %1074 = vmatprep.subr.mxu0 0.0
        %1075 = vmatpush1.msra.mxu0 0.0
        %1076 = vmatprep.subr.mxu0 0.0
        %1077 = vmatpush1.msra.mxu0 0.0
        %1078 = vmatprep.subr.mxu0 0.0
        %1079 = vmatpush1.msra.mxu0 0.0
        %1080 = vmatprep.subr.mxu0 %v1038
        %1081 = vmatpush1.msra.mxu0 %v1037
        %1082 = vmatprep.subr.mxu0 0.0
        %1083 = vmatpush2.msra.mxu0 0.0
        %1084 = vmatprep.subr.mxu0 0.0
        %1085 = vmatpush2.msra.mxu0 0.0
        %1086 = vmatprep.subr.mxu0 0.0
        %1087 = vmatpush2.msra.mxu0 0.0
        %1088 = vmatprep.subr.mxu0 0.0
        %1089 = vmatpush2.msra.mxu0 0.0
        %1090 = vmatprep.subr.mxu0 0.0
        %1091 = vmatpush2.msra.mxu0 0.0
        %1092 = vmatprep.subr.mxu0 0.0
        %1093 = vmatpush2.msra.mxu0 0.0
        %1094 = vmatprep.subr.mxu0 0.0
        %1095 = vmatpush2.msra.mxu0 0.0
        %1096 = vmatprep.subr.mxu0 0.0
        %1097 = vmatpush2.msra.mxu0 0.0
        %1098 = vmatprep.subr.mxu0 0.0
        %1099 = vmatpush2.msra.mxu0 0.0
        %1100 = vmatprep.subr.mxu0 0.0
        %1101 = vmatpush2.msra.mxu0 0.0
        %1102 = vmatprep.subr.mxu0 0.0
        %1103 = vmatpush2.msra.mxu0 0.0
        %1104 = vmatprep.subr.mxu0 0.0
        %1105 = vmatpush2.msra.mxu0 0.0
        %1106 = vmatprep.subr.mxu0 0.0
        %1107 = vmatpush2.msra.mxu0 0.0
        %1108 = vmatprep.subr.mxu0 0.0
        %1109 = vmatpush2.msra.mxu0 0.0
        %1110 = vmatprep.subr.mxu0 0.0
        %1111 = vmatpush2.msra.mxu0 0.0
        %1112 = vmatprep.subr.mxu0 0.0
        %1113 = vmatpush2.msra.mxu0 0.0
        %1114 = vmatprep.mubr.f32.mxu0 0.0
        %1115 = vmatmul.mubr.f32.gmra.mxu0 %v1048
        %v1116 = vpop.f32.mrf.mxu0
        %v1117 = vadd.f32 %v1044, %v1116
        %v1118 = vpop.f32.mrf.mxu0
        %v1119 = vadd.f32 %v1044, %v1118
        %1120 = vdwg.mxu0
        %v1123 = vcombine.low %v1117, %v1119
        %1125 = vst [vmem:[%s284] sm:$0xff] %v1123
        %s1126 = sand.u32 %s182, 1
        %s1127 = scalar_lea.sflag [#allocation4], %s1126
        %s1128 = sand.u32 %s182, 1
        %s1129 = smul.addr %s1128, 8
        %s1130 = scalar_lea.vmem [#allocation5], %s1129
        // Predicated region
        $region53: #{tpu_custom_call.1} parent=47 // pred_check
          %p1131 = pneg %p192
        $region54: #{tpu_custom_call.1} parent=47 // pred_check_branch
          %1133 = sbr.rel (%p1131) target = $region56
        $region55: #{tpu_custom_call.1} parent=47 // pred_region
          %s1135 = ssub.s32 128, 128
          %1136 = vsyncadd %s1127, %s1135
          %s1137 = smul.addr %s22, 2
          %s1138 = smul.addr %s1137, 64
          %s1139 = scalar_lea.hbm %s7, %s1138
          %s1141 = sshll.u32 %s1130, 4
          %s1142 = int_to_ptr.vmem [resolvable:$true] %s1141
          %1144 = dma.vmem_to_hbm [thread:$0]  %s1142, 128, %s1139, %s1127
        $region56: #{tpu_custom_call.1} parent=47 // pred_fallthru
          _
      $region48: #{tpu_custom_call.1} parent=5 // pred_fallthru
        _
      %p1145 = scmp.le.s32.totalorder 2, %s17
      // Predicated region
      $region57: #{tpu_custom_call.1} parent=5 // pred_check
        %p1146 = pneg %p1145
      $region58: #{tpu_custom_call.1} parent=5 // pred_check_branch
        %1148 = sbr.rel (%p1146) target = $region60
      $region59: #{tpu_custom_call.1} parent=5 // pred_region
        %s1149 = ssub.s32 %s17, 2
        // Predicated region
        $region61: #{tpu_custom_call.1} parent=59 // pred_check
          %p1150 = pneg %p198
        $region62: #{tpu_custom_call.1} parent=59 // pred_check_branch
          %1152 = sbr.rel (%p1150) target = $region64
        $region63: #{tpu_custom_call.1} parent=59 // pred_region
          %s1153 = sand.u32 %s183, 1
          %s1154 = scalar_lea.sflag [#allocation4], %s1153
          %s1155 = sand.u32 %s183, 1
          %s1156 = smul.addr %s1155, 8
          %s1157 = scalar_lea.vmem [#allocation5], %s1156
          %1158 = dma.done %s1154, 128
        $region64: #{tpu_custom_call.1} parent=59 // pred_fallthru
          _
      $region60: #{tpu_custom_call.1} parent=5 // pred_fallthru
        _
    $region6: #{tpu_custom_call.1} parent=1 // loop_footer
      %s21 = sadd.s32 1, %s17
    $region7: #{tpu_custom_call.1} parent=1 // loop_footer_branch
      %16 = sbr.rel target = $region3
    $region8: #{tpu_custom_call.1} parent=1 // loop_exit
      _
    %1159 = vsyncpa [#allocation3], 1
    %s1160 = scalar_lea.sflag [#allocation3], 1
    %1161 = vsyncpa %s1160, 1
    %1162 = vsyncpa [#allocation4], 1
    %s1163 = scalar_lea.sflag [#allocation4], 1
    %1164 = vsyncpa %s1163, 1

</llo_original>
